<compile_context>
chip_gen: v6e
topology: v6e:2x2x1
jax: 0.10.0
libtpu: 0.0.40
codegen_flags: <defaults>
</compile_context>

<pallas_src>
import numpy as np
import jax
import jax.numpy as jnp
from jax.experimental import pallas as pl
from jax.experimental.pallas import tpu as pltpu


# ---------------------------------------------------------------------------
# Buffer construction (deterministic, mirrors nn.Module.__init__)
# ---------------------------------------------------------------------------
def make_positional_encoding(d_model: int, max_len: int = 5000,
                             dtype=jnp.float32) -> jax.Array:
    position = np.arange(0, max_len, dtype=np.float32)[:, None]          # (L, 1)
    div_term = np.exp(np.arange(0, d_model, 2, dtype=np.float32)
                      * (-np.log(10000.0) / d_model))                    # (D/2,)
    pe = np.zeros((max_len, d_model), dtype=np.float32)
    pe[:, 0::2] = np.sin(position * div_term)
    pe[:, 1::2] = np.cos(position * div_term)
    pe = pe[:, None, :]                                                  # (L, 1, D)
    return jnp.asarray(pe, dtype=dtype)


# ---------------------------------------------------------------------------
# Pallas kernels
# ---------------------------------------------------------------------------
def _pe_add_kernel(x_ref, pe_ref, o_ref):
    # x_ref: (TM, B, D), pe_ref: (TM, 1, D) -> broadcast add over batch.
    o_ref[...] = (x_ref[...] + pe_ref[...]).astype(o_ref.dtype)


def _pe_add_dropout_kernel(x_ref, pe_ref, m_ref, o_ref):
    # m_ref holds the pre-scaled inverted-dropout mask (0 or 1/(1-p)) in
    # x.dtype, generated in the wrapper with jax.random (portable; no
    # TPU-only PRNG primitives).
    o_ref[...] = ((x_ref[...] + pe_ref[...]) * m_ref[...]).astype(o_ref.dtype)


# ---------------------------------------------------------------------------
# Wrapper
# ---------------------------------------------------------------------------
def _choose_block_rows(T: int, B: int, D: int, itemsize: int,
                       target_bytes: int = 2 << 20) -> int:
    """Rows of T per tile so one x-tile is ~2 MiB (pipelined, all-gen safe)."""
    rows = max(1, target_bytes // max(1, B * D * itemsize))
    rows = min(rows, T)
    if rows >= 8:
        rows = (rows // 8) * 8
    return int(rows)


def positional_encoding_forward(x: jax.Array, pe: jax.Array, *,
                                p: float = 0.1, training: bool = False,
                                seed: int = 0,
                                block_rows: int | None = None) -> jax.Array:
    """Equivalent of PositionalEncoding.forward(x).

    x : (T, B, D)      pe : (max_len, 1, D)
    Eval mode (training=False): dropout is the identity, matching nn.Dropout.eval().
    """
    T, B, D = x.shape
    pe_sl = pe[:T].astype(x.dtype)   # (T, 1, D) — static slice + dtype match (glue)

    itemsize = jnp.dtype(x.dtype).itemsize
    tm = block_rows if block_rows is not None else _choose_block_rows(T, B, D, itemsize)
    tm = max(1, min(int(tm), T))
    grid = (pl.cdiv(T, tm),)

    use_dropout = training and p > 0.0
    if training and p >= 1.0:
        # nn.Dropout(p=1.0) zeroes everything in training mode.
        return jnp.zeros_like(x)

    # VMEM budget: double-buffered x-in (+ mask) + out + pe tiles, plus headroom.
    # Capped at 32 MiB so it is safe on v5e (16 MiB scoped default raised
    # explicitly), v6e and v7x (64 MiB physical per TC).
    x_tile_bytes = tm * B * D * itemsize
    pe_tile_bytes = tm * D * itemsize
    n_big_tiles = 3 if use_dropout else 2   # x-in, (mask-in), out
    vmem_limit = int(min(max(2 * (n_big_tiles * x_tile_bytes + pe_tile_bytes)
                             + (4 << 20), 16 << 20), 32 << 20))

    cparams = pltpu.CompilerParams(
        dimension_semantics=("parallel",),   # v7x: shard T-loop across both TCs
        vmem_limit_bytes=vmem_limit,
    )

    if not use_dropout:
        grid_spec = pltpu.PrefetchScalarGridSpec(
            num_scalar_prefetch=0,
            grid=grid,
            in_specs=[pl.BlockSpec((tm, B, D), lambda i: (i, 0, 0)),
                      pl.BlockSpec((tm, 1, D), lambda i: (i, 0, 0))],
            out_specs=pl.BlockSpec((tm, B, D), lambda i: (i, 0, 0)),
        )
        return pl.pallas_call(
            _pe_add_kernel,
            out_shape=jax.ShapeDtypeStruct(x.shape, x.dtype),
            grid_spec=grid_spec,
            compiler_params=cparams,
        )(x, pe_sl)

    # Training path: inverted dropout.  Mask (0 or 1/(1-p)) is generated with
    # jax.random in the wrapper and streamed through the same T-tiled pipeline.
    # TODO(synk): mask comes from JAX's RNG, not torch's RNG stream, so it is
    # not bit-identical to torch (semantics match: drop w.p. p, keep * 1/(1-p)).
    key = jax.random.PRNGKey(seed)
    keep = jax.random.bernoulli(key, 1.0 - p, x.shape)
    mask = jnp.where(keep, jnp.float32(1.0 / (1.0 - p)),
                     jnp.float32(0.0)).astype(x.dtype)

    grid_spec = pltpu.PrefetchScalarGridSpec(
        num_scalar_prefetch=0,
        grid=grid,
        in_specs=[pl.BlockSpec((tm, B, D), lambda i: (i, 0, 0)),
                  pl.BlockSpec((tm, 1, D), lambda i: (i, 0, 0)),
                  pl.BlockSpec((tm, B, D), lambda i: (i, 0, 0))],
        out_specs=pl.BlockSpec((tm, B, D), lambda i: (i, 0, 0)),
    )
    return pl.pallas_call(
        _pe_add_dropout_kernel,
        out_shape=jax.ShapeDtypeStruct(x.shape, x.dtype),
        grid_spec=grid_spec,
        compiler_params=cparams,
    )(x, pe_sl, mask)


# ---------------------------------------------------------------------------
# Demo / self-test
# ---------------------------------------------------------------------------
if __name__ == "__main__":
    seq_len, batch, d_model = 64, 2, 32
    max_len = 128  # small max_len for the demo buffer (module default is 5000)

    key = jax.random.PRNGKey(0)
    x = jax.random.normal(key, (seq_len, batch, d_model), dtype=jnp.float32)

    pe = make_positional_encoding(d_model, max_len=max_len)

    # --- Eval-mode forward (dropout == identity), matching module.eval()(x). ---
    # block_rows=16 forces a 4-step T grid so the tiled pipeline is exercised.
    out = positional_encoding_forward(x, pe, p=0.1, training=False, block_rows=16)
    out = jax.block_until_ready(out)

    ref = x + pe[:seq_len]
    np.testing.assert_allclose(np.asarray(out), np.asarray(ref),
                               rtol=1e-6, atol=1e-6)

    # --- Training-mode forward: semantic checks of inverted dropout. ---
    p = 0.1
    out_tr = positional_encoding_forward(x, pe, p=p, training=True,
                                         seed=123, block_rows=16)
    out_tr = jax.block_until_ready(out_tr)
    out_np, ref_np = np.asarray(out_tr), np.asarray(ref)
    kept = out_np != 0.0
    # Kept elements must equal (x + pe) / (1 - p); dropped elements are zero.
    np.testing.assert_allclose(out_np[kept], (ref_np / (1.0 - p))[kept],
                               rtol=1e-5, atol=1e-5)
    drop_frac = 1.0 - kept.mean()
    assert 0.0 <= drop_frac < 0.3, f"implausible drop fraction {drop_frac:.3f}"

    print("KERNEL_OK")
</pallas_src>

<mosaic_0001>
module attributes {stable_mosaic.version = 11 : i64} {
  func.func @_pe_add_kernel(%arg0: i32, %arg1: memref<16x2x32xf32, #tpu.memory_space<vmem>>, %arg2: memref<16x1x32xf32, #tpu.memory_space<vmem>>, %arg3: memref<16x2x32xf32, #tpu.memory_space<vmem>>) attributes {dimension_semantics = [#tpu.dimension_semantics<parallel>], iteration_bounds = array<i64: 4>, scalar_prefetch = 0 : i64, scratch_operands = 0 : i64, tpu.core_type = #tpu.core_type<tc>, window_params = [{transform_indices = @transform_0, window_bounds = array<i64: 16, 2, 32>}, {transform_indices = @transform_1, window_bounds = array<i64: 16, 1, 32>}, {transform_indices = @transform_2, window_bounds = array<i64: 16, 2, 32>}]} {
    %c0 = arith.constant 0 : index
    %c0_0 = arith.constant 0 : index
    %c0_1 = arith.constant 0 : index
    %0 = vector.load %arg1[%c0, %c0_0, %c0_1] : memref<16x2x32xf32, #tpu.memory_space<vmem>>, vector<16x2x32xf32>
    %c0_2 = arith.constant 0 : index
    %c0_3 = arith.constant 0 : index
    %c0_4 = arith.constant 0 : index
    %1 = vector.load %arg2[%c0_2, %c0_3, %c0_4] : memref<16x1x32xf32, #tpu.memory_space<vmem>>, vector<16x1x32xf32>
    %2 = vector.broadcast %1 : vector<16x1x32xf32> to vector<16x2x32xf32>
    %3 = arith.addf %0, %2 : vector<16x2x32xf32>
    %c0_5 = arith.constant 0 : index
    %c0_6 = arith.constant 0 : index
    %c0_7 = arith.constant 0 : index
    %4 = vector.load %arg3[%c0_5, %c0_6, %c0_7] : memref<16x2x32xf32, #tpu.memory_space<vmem>>, vector<16x2x32xf32>
    tpu.vector_store %arg3[%c0_5, %c0_6, %c0_7], %3 {strides = array<i32>} : memref<16x2x32xf32, #tpu.memory_space<vmem>>, vector<16x2x32xf32>,
    return
  }
  func.func @transform_0(%arg0: i32) -> (i32, i32, i32) {
    %c0_i32 = arith.constant 0 : i32
    %c0_i32_0 = arith.constant 0 : i32
    %c0_i32_1 = arith.constant 0 : i32
    return %arg0, %c0_i32, %c0_i32_0 : i32, i32, i32
  }
  func.func @transform_1(%arg0: i32) -> (i32, i32, i32) {
    %c0_i32 = arith.constant 0 : i32
    %c0_i32_0 = arith.constant 0 : i32
    %c0_i32_1 = arith.constant 0 : i32
    return %arg0, %c0_i32, %c0_i32_0 : i32, i32, i32
  }
  func.func @transform_2(%arg0: i32) -> (i32, i32, i32) {
    %c0_i32 = arith.constant 0 : i32
    %c0_i32_0 = arith.constant 0 : i32
    %c0_i32_1 = arith.constant 0 : i32
    return %arg0, %c0_i32, %c0_i32_0 : i32, i32, i32
  }
}

</mosaic_0001>

<llo_original>
// kernel: tpu_custom_call.1
$region0: #{tpu_custom_call.1}
  #allocation0 [shape = 'u32[]', space=smem, size = 0x4, offset = 0x4, fixed_abs, tag = 'smem constant byte address 0x4 - core index']
  #allocation1 [shape = 'u32[144,128]{1,0:T(1,128)}', space=vmem, size = 0x12000, scoped, tag = 'internal scratch']
  %s0 = inlined_call_operand.vmem [shape: f32[64,2,32], index: 0, kind: input, shape index: {}]
  %s1 = inlined_call_operand.vmem [shape: f32[64,1,32], index: 1, kind: input, shape index: {}]
  %s2 = inlined_call_operand.vmem [shape: f32[64,2,32], index: 2, kind: output, shape index: {}]
  %s3 = sld [smem:[#allocation0]]
  $region41: #{tpu_custom_call.1} parent=0
    _
  %s5 = ssub.s32 1, %s3
  %s6 = scalar_select 0, %s5, %s3
  loop: start=0, step=1, limit=6
  $region2: #{tpu_custom_call.1} parent=0 // loop_pre_header
    _
  $region3: #{tpu_custom_call.1} parent=0 // loop_header
    %s8 = sphi 0, %s12
    %p9 = scmp.ge.s32.totalorder %s8, 6
    %s18 = sphi 0, %s20
    %s21 = sphi 0, %s18
    %s22 = sphi 0, %s21
    %s38 = sphi 0, %s22
    %s44 = sphi 0, %s46
    %s47 = sphi 0, %s44
    %s48 = sphi 0, %s47
    %s64 = sphi 0, %s48
    %s70 = sphi 0, %s72
    %s73 = sphi 0, %s70
    %s74 = sphi 0, %s73
    %s90 = sphi 0, %s74
  $region4: #{tpu_custom_call.1} parent=0 // loop_header_branch
    %11 = sbr.rel (%p9) target = $region8
  $region5: #{tpu_custom_call.1} parent=0 // loop_body
    %s13 = ssub.s32 %s8, 1
    %s14 = ssub.s32 %s8, 2
    %s15 = sadd.s32 %s8, 1
    %s16 = ssub.s32 %s8, %s15
    %p17 = scmp.eq.s32.totalorder %s16, 0
    %s19 = sadd.s32 %s18, 1
    %s20 = scalar_select %p17, %s18, %s19
    %p23 = pneg %p17
    %p24 = scmp.eq.s32.totalorder %s8, 3
    %p25 = por %p23, %p24
    %p26 = scmp.ne.s32.totalorder %s18, %s21
    %p27 = scmp.eq.s32.totalorder %s8, 0
    %p28 = por %p26, %p27
    %p29 = scmp.ne.s32.totalorder %s18, %s21
    %p30 = scmp.eq.s32.totalorder %s13, 3
    %p31 = por %p29, %p30
    %p32 = scmp.ne.s32.totalorder %s21, %s22
    %p33 = scmp.eq.s32.totalorder %s13, 0
    %p34 = por %p32, %p33
    %p35 = scmp.ne.s32.totalorder %s21, %s22
    %p36 = scmp.eq.s32.totalorder %s14, 3
    %p37 = por %p35, %p36
    %p39 = scmp.ne.s32.totalorder %s22, %s38
    %p40 = scmp.eq.s32.totalorder %s14, 0
    %p41 = por %p39, %p40
    %s42 = ssub.s32 %s8, %s15
    %p43 = scmp.eq.s32.totalorder %s42, 0
    %s45 = sadd.s32 %s44, 1
    %s46 = scalar_select %p43, %s44, %s45
    %p49 = pneg %p43
    %p50 = scmp.eq.s32.totalorder %s8, 3
    %p51 = por %p49, %p50
    %p52 = scmp.ne.s32.totalorder %s44, %s47
    %p53 = scmp.eq.s32.totalorder %s8, 0
    %p54 = por %p52, %p53
    %p55 = scmp.ne.s32.totalorder %s44, %s47
    %p56 = scmp.eq.s32.totalorder %s13, 3
    %p57 = por %p55, %p56
    %p58 = scmp.ne.s32.totalorder %s47, %s48
    %p59 = scmp.eq.s32.totalorder %s13, 0
    %p60 = por %p58, %p59
    %p61 = scmp.ne.s32.totalorder %s47, %s48
    %p62 = scmp.eq.s32.totalorder %s14, 3
    %p63 = por %p61, %p62
    %p65 = scmp.ne.s32.totalorder %s48, %s64
    %p66 = scmp.eq.s32.totalorder %s14, 0
    %p67 = por %p65, %p66
    %s68 = ssub.s32 %s8, %s15
    %p69 = scmp.eq.s32.totalorder %s68, 0
    %s71 = sadd.s32 %s70, 1
    %s72 = scalar_select %p69, %s70, %s71
    %p75 = pneg %p69
    %p76 = scmp.eq.s32.totalorder %s8, 3
    %p77 = por %p75, %p76
    %p78 = scmp.ne.s32.totalorder %s70, %s73
    %p79 = scmp.eq.s32.totalorder %s8, 0
    %p80 = por %p78, %p79
    %p81 = scmp.ne.s32.totalorder %s70, %s73
    %p82 = scmp.eq.s32.totalorder %s13, 3
    %p83 = por %p81, %p82
    %p84 = scmp.ne.s32.totalorder %s73, %s74
    %p85 = scmp.eq.s32.totalorder %s13, 0
    %p86 = por %p84, %p85
    %p87 = scmp.ne.s32.totalorder %s73, %s74
    %p88 = scmp.eq.s32.totalorder %s14, 3
    %p89 = por %p87, %p88
    %p91 = scmp.ne.s32.totalorder %s74, %s90
    %p92 = scmp.eq.s32.totalorder %s14, 0
    %p93 = por %p91, %p92
    %p94 = scmp.le.s32.totalorder 1, %s8
    %p95 = scmp.lt.s32.totalorder %s8, 5
    %p96 = pnand %p94, %p95
    %p97 = pneg %p96
    // Predicated region
    $region9: #{tpu_custom_call.1} parent=5 // pred_check
      _
    $region10: #{tpu_custom_call.1} parent=5 // pred_check_branch
      %99 = sbr.rel (%p96) target = $region12
    $region11: #{tpu_custom_call.1} parent=5 // pred_region
      %s100 = ssub.s32 %s8, 1
    $region12: #{tpu_custom_call.1} parent=5 // pred_fallthru
      _
    %p101 = scmp.lt.s32.totalorder %s8, 4
    // Predicated region
    $region13: #{tpu_custom_call.1} parent=5 // pred_check
      %p102 = pneg %p101
    $region14: #{tpu_custom_call.1} parent=5 // pred_check_branch
      %104 = sbr.rel (%p102) target = $region16
    $region15: #{tpu_custom_call.1} parent=5 // pred_region
      // Predicated region
      $region17: #{tpu_custom_call.1} parent=15 // pred_check
        %p105 = pneg %p28
      $region18: #{tpu_custom_call.1} parent=15 // pred_check_branch
        %107 = sbr.rel (%p105) target = $region20
      $region19: #{tpu_custom_call.1} parent=15 // pred_region
        %s108 = smul.u32 16, %s8
        %p109 = scmp.lt.s32.totalorder %s108, 63
        %s110 = scalar_select %p109, %s108, 63
        %s111 = smul.addr %s110, 2
        %s112 = scalar_lea.vmem %s0, %s111
        %s113 = smul.u32 16, %s8
      $region20: #{tpu_custom_call.1} parent=15 // pred_fallthru
        _
      // Predicated region
      $region21: #{tpu_custom_call.1} parent=15 // pred_check
        %p114 = pneg %p54
      $region22: #{tpu_custom_call.1} parent=15 // pred_check_branch
        %116 = sbr.rel (%p114) target = $region24
      $region23: #{tpu_custom_call.1} parent=15 // pred_region
        %s117 = smul.u32 16, %s8
        %p118 = scmp.lt.s32.totalorder %s117, 63
        %s119 = scalar_select %p118, %s117, 63
        %s120 = scalar_lea.vmem %s1, %s119
        %s121 = smul.u32 16, %s8
      $region24: #{tpu_custom_call.1} parent=15 // pred_fallthru
        _
    $region16: #{tpu_custom_call.1} parent=5 // pred_fallthru
      _
    %p122 = scmp.le.s32.totalorder 1, %s8
    %p123 = scmp.lt.s32.totalorder %s8, 5
    %p124 = pnand %p122, %p123
    %p125 = pneg %p124
    // Predicated region
    $region25: #{tpu_custom_call.1} parent=5 // pred_check
      _
    $region26: #{tpu_custom_call.1} parent=5 // pred_check_branch
      %127 = sbr.rel (%p124) target = $region28
    $region27: #{tpu_custom_call.1} parent=5 // pred_region
      %s128 = ssub.s32 %s8, 1
      %s129 = smul.u32 16, %s13
      %p130 = scmp.lt.s32.totalorder %s129, 63
      %s131 = scalar_select %p130, %s129, 63
      %s132 = smul.addr %s131, 2
      %s133 = scalar_lea.vmem %s0, %s132
      %p134 = pneg %p34
      %p135 = pneg %p31
      %s136 = smul.u32 16, %s13
      %p137 = scmp.lt.s32.totalorder %s136, 63
      %s138 = scalar_select %p137, %s136, 63
      %s139 = scalar_lea.vmem %s1, %s138
      %p140 = pneg %p60
      %p141 = pneg %p57
      %p142 = pneg %p86
      %p143 = pneg %p83
      %s144 = smul.u32 16, %s13
      %p145 = scmp.lt.s32.totalorder %s144, 63
      %s146 = scalar_select %p145, %s144, 63
      %s147 = smul.addr %s146, 2
      %s148 = scalar_lea.vmem %s2, %s147
      %s149 = smul.u32 16, %s13
      %p150 = scmp.lt.s32.totalorder %s149, 63
      %s151 = scalar_select %p150, %s149, 63
      %s152 = smul.addr %s151, 2
      %s153 = scalar_lea.vmem %s0, %s152
      %s154 = smul.u32 16, %s13
      %s155 = smul.u32 16, %s13
      %p156 = scmp.lt.s32.totalorder %s155, 63
      %s157 = scalar_select %p156, %s155, 63
      %s158 = scalar_lea.vmem %s1, %s157
      %s159 = smul.u32 16, %s13
      %s160 = smul.u32 16, %s13
      %p161 = scmp.lt.s32.totalorder %s160, 63
      %s162 = scalar_select %p161, %s160, 63
      %s163 = smul.addr %s162, 2
      %s164 = scalar_lea.vmem %s2, %s163
      %s165 = smul.u32 16, %s13
      %v166 = vld [vmem:[%s153] sm:$0x3]
      %v167 = vld [vmem:[%s153 + $0x2] sm:$0x3]
      %v168 = vld [vmem:[%s153 + $0x4] sm:$0x3]
      %v169 = vld [vmem:[%s153 + $0x6] sm:$0x3]
      %v170 = vld [vmem:[%s153 + $0x8] sm:$0x3]
      %v171 = vld [vmem:[%s153 + $0xa] sm:$0x3]
      %v172 = vld [vmem:[%s153 + $0xc] sm:$0x3]
      %v173 = vld [vmem:[%s153 + $0xe] sm:$0x3]
      %v174 = vld [vmem:[%s153 + $0x10] sm:$0x3]
      %v175 = vld [vmem:[%s153 + $0x12] sm:$0x3]
      %v176 = vld [vmem:[%s153 + $0x14] sm:$0x3]
      %v177 = vld [vmem:[%s153 + $0x16] sm:$0x3]
      %v178 = vld [vmem:[%s153 + $0x18] sm:$0x3]
      %v179 = vld [vmem:[%s153 + $0x1a] sm:$0x3]
      %v180 = vld [vmem:[%s153 + $0x1c] sm:$0x3]
      %v181 = vld [vmem:[%s153 + $0x1e] sm:$0x3]
      %v182 = vld [vmem:[%s158] sm:$0x1]
      %v183 = vld [vmem:[%s158 + $0x1] sm:$0x1]
      %v184 = vld [vmem:[%s158 + $0x2] sm:$0x1]
      %v185 = vld [vmem:[%s158 + $0x3] sm:$0x1]
      %v186 = vld [vmem:[%s158 + $0x4] sm:$0x1]
      %v187 = vld [vmem:[%s158 + $0x5] sm:$0x1]
      %v188 = vld [vmem:[%s158 + $0x6] sm:$0x1]
      %v189 = vld [vmem:[%s158 + $0x7] sm:$0x1]
      %v190 = vld [vmem:[%s158 + $0x8] sm:$0x1]
      %v191 = vld [vmem:[%s158 + $0x9] sm:$0x1]
      %v192 = vld [vmem:[%s158 + $0xa] sm:$0x1]
      %v193 = vld [vmem:[%s158 + $0xb] sm:$0x1]
      %v194 = vld [vmem:[%s158 + $0xc] sm:$0x1]
      %v195 = vld [vmem:[%s158 + $0xd] sm:$0x1]
      %v196 = vld [vmem:[%s158 + $0xe] sm:$0x1]
      %v197 = vld [vmem:[%s158 + $0xf] sm:$0x1]
      %v214 = vlaneseq
      %v215 = vshrl.u32 %v214, 7
      %v216 = vsub.s32 0, %v215
      %v217 = vrot.slane %v182, %v216
      %v218 = vlaneseq
      %v219 = vshrl.u32 %v218, 7
      %v220 = vsub.s32 0, %v219
      %v221 = vrot.slane %v183, %v220
      %v222 = vlaneseq
      %v223 = vshrl.u32 %v222, 7
      %v224 = vsub.s32 0, %v223
      %v225 = vrot.slane %v184, %v224
      %v226 = vlaneseq
      %v227 = vshrl.u32 %v226, 7
      %v228 = vsub.s32 0, %v227
      %v229 = vrot.slane %v185, %v228
      %v230 = vlaneseq
      %v231 = vshrl.u32 %v230, 7
      %v232 = vsub.s32 0, %v231
      %v233 = vrot.slane %v186, %v232
      %v234 = vlaneseq
      %v235 = vshrl.u32 %v234, 7
      %v236 = vsub.s32 0, %v235
      %v237 = vrot.slane %v187, %v236
      %v238 = vlaneseq
      %v239 = vshrl.u32 %v238, 7
      %v240 = vsub.s32 0, %v239
      %v241 = vrot.slane %v188, %v240
      %v242 = vlaneseq
      %v243 = vshrl.u32 %v242, 7
      %v244 = vsub.s32 0, %v243
      %v245 = vrot.slane %v189, %v244
      %v246 = vlaneseq
      %v247 = vshrl.u32 %v246, 7
      %v248 = vsub.s32 0, %v247
      %v249 = vrot.slane %v190, %v248
      %v250 = vlaneseq
      %v251 = vshrl.u32 %v250, 7
      %v252 = vsub.s32 0, %v251
      %v253 = vrot.slane %v191, %v252
      %v254 = vlaneseq
      %v255 = vshrl.u32 %v254, 7
      %v256 = vsub.s32 0, %v255
      %v257 = vrot.slane %v192, %v256
      %v258 = vlaneseq
      %v259 = vshrl.u32 %v258, 7
      %v260 = vsub.s32 0, %v259
      %v261 = vrot.slane %v193, %v260
      %v262 = vlaneseq
      %v263 = vshrl.u32 %v262, 7
      %v264 = vsub.s32 0, %v263
      %v265 = vrot.slane %v194, %v264
      %v266 = vlaneseq
      %v267 = vshrl.u32 %v266, 7
      %v268 = vsub.s32 0, %v267
      %v269 = vrot.slane %v195, %v268
      %v270 = vlaneseq
      %v271 = vshrl.u32 %v270, 7
      %v272 = vsub.s32 0, %v271
      %v273 = vrot.slane %v196, %v272
      %v274 = vlaneseq
      %v275 = vshrl.u32 %v274, 7
      %v276 = vsub.s32 0, %v275
      %v277 = vrot.slane %v197, %v276
      %v294 = vadd.f32 %v166, %v217
      %v295 = vadd.f32 %v167, %v221
      %v296 = vadd.f32 %v168, %v225
      %v297 = vadd.f32 %v169, %v229
      %v298 = vadd.f32 %v170, %v233
      %v299 = vadd.f32 %v171, %v237
      %v300 = vadd.f32 %v172, %v241
      %v301 = vadd.f32 %v173, %v245
      %v302 = vadd.f32 %v174, %v249
      %v303 = vadd.f32 %v175, %v253
      %v304 = vadd.f32 %v176, %v257
      %v305 = vadd.f32 %v177, %v261
      %v306 = vadd.f32 %v178, %v265
      %v307 = vadd.f32 %v179, %v269
      %v308 = vadd.f32 %v180, %v273
      %v309 = vadd.f32 %v181, %v277
      %vm310 = vcmask 254976
      %311 = vst.msk [vmem:[%s164] sm:$0x3] %vm310, %v294
      %312 = vst.msk [vmem:[%s164 + $0x2] sm:$0x3] %vm310, %v295
      %313 = vst.msk [vmem:[%s164 + $0x4] sm:$0x3] %vm310, %v296
      %314 = vst.msk [vmem:[%s164 + $0x6] sm:$0x3] %vm310, %v297
      %315 = vst.msk [vmem:[%s164 + $0x8] sm:$0x3] %vm310, %v298
      %316 = vst.msk [vmem:[%s164 + $0xa] sm:$0x3] %vm310, %v299
      %317 = vst.msk [vmem:[%s164 + $0xc] sm:$0x3] %vm310, %v300
      %318 = vst.msk [vmem:[%s164 + $0xe] sm:$0x3] %vm310, %v301
      %319 = vst.msk [vmem:[%s164 + $0x10] sm:$0x3] %vm310, %v302
      %320 = vst.msk [vmem:[%s164 + $0x12] sm:$0x3] %vm310, %v303
      %321 = vst.msk [vmem:[%s164 + $0x14] sm:$0x3] %vm310, %v304
      %322 = vst.msk [vmem:[%s164 + $0x16] sm:$0x3] %vm310, %v305
      %323 = vst.msk [vmem:[%s164 + $0x18] sm:$0x3] %vm310, %v306
      %324 = vst.msk [vmem:[%s164 + $0x1a] sm:$0x3] %vm310, %v307
      %325 = vst.msk [vmem:[%s164 + $0x1c] sm:$0x3] %vm310, %v308
      %326 = vst.msk [vmem:[%s164 + $0x1e] sm:$0x3] %vm310, %v309
      %s327 = smul.u32 16, %s13
      %p328 = scmp.lt.s32.totalorder %s327, 63
      %s329 = scalar_select %p328, %s327, 63
      %s330 = smul.addr %s329, 2
      %s331 = scalar_lea.vmem %s2, %s330
      // Predicated region
      $region29: #{tpu_custom_call.1} parent=27 // pred_check
        %p332 = pneg %p83
      $region30: #{tpu_custom_call.1} parent=27 // pred_check_branch
        %334 = sbr.rel (%p332) target = $region32
      $region31: #{tpu_custom_call.1} parent=27 // pred_region
        %s335 = smul.u32 16, %s13
      $region32: #{tpu_custom_call.1} parent=27 // pred_fallthru
        _
    $region28: #{tpu_custom_call.1} parent=5 // pred_fallthru
      _
    %p336 = scmp.le.s32.totalorder 2, %s8
    // Predicated region
    $region33: #{tpu_custom_call.1} parent=5 // pred_check
      %p337 = pneg %p336
    $region34: #{tpu_custom_call.1} parent=5 // pred_check_branch
      %339 = sbr.rel (%p337) target = $region36
    $region35: #{tpu_custom_call.1} parent=5 // pred_region
      %s340 = ssub.s32 %s8, 2
      // Predicated region
      $region37: #{tpu_custom_call.1} parent=35 // pred_check
        %p341 = pneg %p89
      $region38: #{tpu_custom_call.1} parent=35 // pred_check_branch
        %343 = sbr.rel (%p341) target = $region40
      $region39: #{tpu_custom_call.1} parent=35 // pred_region
        %s344 = smul.u32 16, %s14
        %p345 = scmp.lt.s32.totalorder %s344, 63
        %s346 = scalar_select %p345, %s344, 63
        %s347 = smul.addr %s346, 2
        %s348 = scalar_lea.vmem %s2, %s347
      $region40: #{tpu_custom_call.1} parent=35 // pred_fallthru
        _
    $region36: #{tpu_custom_call.1} parent=5 // pred_fallthru
      _
  $region6: #{tpu_custom_call.1} parent=0 // loop_footer
    %s12 = sadd.s32 1, %s8
  $region7: #{tpu_custom_call.1} parent=0 // loop_footer_branch
    %7 = sbr.rel target = $region3
  $region8: #{tpu_custom_call.1} parent=0 // loop_exit
    _

</llo_original>
